<compile_context>
chip_gen: v7x
topology: tpu7x:2x2x1
jax: 0.10.0
libtpu: 0.0.40
codegen_flags: <defaults>
</compile_context>

<pallas_src>
import functools

import jax
import jax.numpy as jnp
from jax.experimental import pallas as pl
from jax.experimental.pallas import tpu as pltpu

# ---------------- module hyper-parameters (deterministic, in-script) ----------------
DILATIONS = (1, 2, 4)
IN_CHANNELS = 4
OUT_CHANNELS = 4
KERNEL_SIZE = 3
STRIDE = 1          # implemented path
GROUPS = 1          # implemented path


def _distinct_offsets(dilations, k):
    """Sorted distinct circular tap offsets t*d - (k-1)*d//2 across all dilations."""
    offs = {t * d - (k - 1) * d // 2 for d in dilations for t in range(k)}
    return tuple(sorted(offs))


def _pack_params(weights, biases, dilations):
    """Reorganize (D, C_out, C_in, K) weights / (D, C_out) biases for the kernel.

    Returns
      w2: (C_out*D, n_off*C_in)  rows in the final torch channel order
          (channel = c_out*D + d), columns indexed by (offset_idx, c_in) — the
          exact row order of the in-kernel concatenated rolled-input stack.
      b2: (C_out*D, 1)           bias column in the same row order.
      offsets: tuple of the distinct circular tap offsets.
    Runs under jax.jit (traced once per shape), so it costs nothing per call.
    """
    d_num, c_out, c_in, kk = weights.shape
    offsets = _distinct_offsets(dilations, kk)
    n_off = len(offsets)
    # w4[off_idx, c, o, di] = weights[di, o, c, t] for the tap t of dilation di
    # whose circular offset equals offsets[off_idx] (0 if that dilation has none).
    w4 = jnp.zeros((n_off, c_in, c_out, d_num), weights.dtype)
    for di, d in enumerate(dilations):
        p = (kk - 1) * d // 2
        for t in range(kk):
            j = offsets.index(t * d - p)
            w4 = w4.at[j, :, :, di].add(jnp.transpose(weights[di, :, :, t]))
    w2 = jnp.transpose(w4, (2, 3, 0, 1)).reshape(c_out * d_num, n_off * c_in)
    b2 = jnp.transpose(biases).reshape(c_out * d_num, 1)
    return w2, b2, offsets


def _atrous_kernel(x_ref, w_ref, b_ref, o_ref, *, offsets, l, tb):
    """TB batch elements: all dilations' circular dilated convs, fused, on the MXU.

    x_ref: (TB, C_in, L)           unpadded input block, L on the lane axis
    w_ref: (C_out*D, n_off*C_in)   packed weights (rows = final channel order)
    b_ref: (C_out*D, 1)            packed bias column
    o_ref: (TB, C_out*D, L)        output block, already in torch channel order
    """
    w = w_ref[...]                                     # (n_rows, n_off*C_in)
    bias = b_ref[...]                                  # (n_rows, 1)
    for b in range(tb):                                # static, small (TB <= 8)
        xb = x_ref[b]                                  # (C_in, L)
        taps = []
        for off in offsets:
            shift = (-off) % l
            # xs[c, i] = x[c, (i + off) mod L] — circular tap via XLU lane rotate
            taps.append(xb if shift == 0 else pltpu.roll(xb, shift=shift, axis=1))
        xs = jnp.concatenate(taps, axis=0)             # (n_off*C_in, L)
        # One MXU matmul replaces the 28 VPU broadcast-FMAs of v2.
        acc = jnp.dot(w, xs,
                      preferred_element_type=jnp.float32,
                      precision=jax.lax.Precision.HIGHEST) + bias
        o_ref[b] = acc.astype(o_ref.dtype)


@functools.partial(jax.jit, static_argnames=("batch_tile",))
def atrous_convolution(x, weights, biases, batch_tile=None):
    """x: (B, C_in, L) float32 -> (B, C_out*D, L), identical to the torch module."""
    b_sz, c_in, l = x.shape
    d_num, c_out = weights.shape[0], weights.shape[1]
    n_rows = c_out * d_num

    # Default batch tile: amortize per-step overhead but keep grid >= 2 so the
    # "parallel" axis can still shard across both v7x TensorCores.
    if batch_tile is None:
        batch_tile = 1
        for cand in (8, 4, 2):
            if b_sz % cand == 0 and b_sz // cand >= 2:
                batch_tile = cand
                break
    assert b_sz % batch_tile == 0, (b_sz, batch_tile)
    grid = (b_sz // batch_tile,)

    w2, b2, offsets = _pack_params(weights, biases, DILATIONS)
    n_cols = len(offsets) * c_in

    kernel = functools.partial(_atrous_kernel, offsets=offsets, l=l, tb=batch_tile)

    # Scoped-VMEM budget: double-buffered input + output blocks (sublane-padded)
    # plus headroom; capped at v7x's 64 MiB physical VMEM.
    pad8 = lambda n: -(-n // 8) * 8
    blk_in = batch_tile * pad8(c_in) * l * 4
    blk_out = batch_tile * pad8(n_rows) * l * 4
    vmem_limit = int(min(max(4 * (blk_in + blk_out) + (4 << 20), 32 << 20), 64 << 20))

    # Output comes out of the kernel already in the final (B, C_out*D, L) layout:
    # no transpose / reshape HBM pass in the wrapper.
    return pl.pallas_call(
        kernel,
        out_shape=jax.ShapeDtypeStruct((b_sz, n_rows, l), jnp.float32),
        grid=grid,
        in_specs=[
            pl.BlockSpec((batch_tile, c_in, l), lambda i: (i, 0, 0)),
            pl.BlockSpec((n_rows, n_cols), lambda i: (0, 0)),
            pl.BlockSpec((n_rows, 1), lambda i: (0, 0)),
        ],
        out_specs=pl.BlockSpec((batch_tile, n_rows, l), lambda i: (i, 0, 0)),
        compiler_params=pltpu.CompilerParams(
            dimension_semantics=("parallel",),
            vmem_limit_bytes=vmem_limit),
    )(x, w2, b2)


def _reference(x, weights, biases):
    """Pure-JAX reference of the torch forward (circular dilated conv1d stack)."""
    b_sz, c_in, l_out = x.shape
    d_num, c_out, _, k = weights.shape
    per_dilation = []
    for di, d in enumerate(DILATIONS):
        p = (k - 1) * d // 2
        out = jnp.zeros((b_sz, c_out, l_out), jnp.float32)
        for t in range(k):
            idx = (jnp.arange(l_out) + t * d - p) % l_out
            out = out + jnp.einsum("oc,bcl->bol", weights[di, :, :, t], x[:, :, idx],
                                   precision=jax.lax.Precision.HIGHEST)
        per_dilation.append(out + biases[di][None, :, None])
    stacked = jnp.stack(per_dilation, axis=2)          # (B, C_out, D, L)
    return stacked.reshape(b_sz, c_out * d_num, l_out)


if __name__ == "__main__":
    key = jax.random.PRNGKey(0)
    kx1, kx2, kw, kb = jax.random.split(key, 4)

    D = len(DILATIONS)
    # one Conv1d weight (C_out, C_in, K) per dilation, stacked along axis 0
    weights = jax.random.normal(
        kw, (D, OUT_CHANNELS, IN_CHANNELS, KERNEL_SIZE), dtype=jnp.float32) * 0.1
    biases = jax.random.normal(kb, (D, OUT_CHANNELS), dtype=jnp.float32) * 0.1

    # Case 1: module-sized toy shape (B=2, C_in=4, L=16) -> TB=1, grid=2.
    x1 = jax.random.normal(kx1, (2, IN_CHANNELS, 16), dtype=jnp.float32)
    out1 = jax.block_until_ready(atrous_convolution(x1, weights, biases))
    ref1 = _reference(x1, weights, biases)
    assert out1.shape == (2, OUT_CHANNELS * D, 16), out1.shape
    assert jnp.allclose(out1, ref1, rtol=1e-4, atol=1e-4), \
        float(jnp.max(jnp.abs(out1 - ref1)))

    # Case 2: lane-dense L (multiple of 128) + batch tiling (B=4 -> TB=2, grid=2),
    # exercising the MXU/concat path at a non-toy lane width.
    x2 = jax.random.normal(kx2, (4, IN_CHANNELS, 128), dtype=jnp.float32)
    out2 = jax.block_until_ready(atrous_convolution(x2, weights, biases))
    ref2 = _reference(x2, weights, biases)
    assert out2.shape == (4, OUT_CHANNELS * D, 128), out2.shape
    assert jnp.allclose(out2, ref2, rtol=1e-4, atol=1e-4), \
        float(jnp.max(jnp.abs(out2 - ref2)))

    print("KERNEL_OK")
</pallas_src>

<mosaic_0001>
module attributes {stable_mosaic.version = 11 : i64} {
  func.func @_atrous_kernel(%arg0: i32, %arg1: memref<1x4x16xf32, #tpu.memory_space<vmem>>, %arg2: memref<12x28xf32, #tpu.memory_space<vmem>>, %arg3: memref<12x1xf32, #tpu.memory_space<vmem>>, %arg4: memref<1x12x16xf32, #tpu.memory_space<vmem>>) attributes {dimension_semantics = [#tpu.dimension_semantics<parallel>], iteration_bounds = array<i64: 2>, scalar_prefetch = 0 : i64, scratch_operands = 0 : i64, tpu.core_type = #tpu.core_type<tc>, window_params = [{transform_indices = @transform_0, window_bounds = array<i64: 1, 4, 16>}, {pipeline_mode = #tpu.pipeline_mode<synchronous>, transform_indices = @transform_1, window_bounds = array<i64: 12, 28>}, {pipeline_mode = #tpu.pipeline_mode<synchronous>, transform_indices = @transform_2, window_bounds = array<i64: 12, 1>}, {transform_indices = @transform_3, window_bounds = array<i64: 1, 12, 16>}]} {
    %c0 = arith.constant 0 : index
    %c0_0 = arith.constant 0 : index
    %0 = vector.load %arg2[%c0, %c0_0] : memref<12x28xf32, #tpu.memory_space<vmem>>, vector<12x28xf32>
    %c0_1 = arith.constant 0 : index
    %c0_2 = arith.constant 0 : index
    %1 = vector.load %arg3[%c0_1, %c0_2] : memref<12x1xf32, #tpu.memory_space<vmem>>, vector<12x1xf32>
    %c0_3 = arith.constant 0 : index
    %c0_4 = arith.constant 0 : index
    %c0_5 = arith.constant 0 : index
    %2 = vector.load %arg1[%c0_3, %c0_4, %c0_5] : memref<1x4x16xf32, #tpu.memory_space<vmem>>, vector<1x4x16xf32>
    %3 = vector.shape_cast %2 : vector<1x4x16xf32> to vector<4x16xf32>
    %c4_i32 = arith.constant 4 : i32
    %4 = tpu.dynamic_rotate %3 by %c4_i32 dim 1 : vector<4x16xf32>, i32 -> vector<4x16xf32>
    %c2_i32 = arith.constant 2 : i32
    %5 = tpu.dynamic_rotate %3 by %c2_i32 dim 1 : vector<4x16xf32>, i32 -> vector<4x16xf32>
    %c1_i32 = arith.constant 1 : i32
    %6 = tpu.dynamic_rotate %3 by %c1_i32 dim 1 : vector<4x16xf32>, i32 -> vector<4x16xf32>
    %c15_i32 = arith.constant 15 : i32
    %7 = tpu.dynamic_rotate %3 by %c15_i32 dim 1 : vector<4x16xf32>, i32 -> vector<4x16xf32>
    %c14_i32 = arith.constant 14 : i32
    %8 = tpu.dynamic_rotate %3 by %c14_i32 dim 1 : vector<4x16xf32>, i32 -> vector<4x16xf32>
    %c12_i32 = arith.constant 12 : i32
    %9 = tpu.dynamic_rotate %3 by %c12_i32 dim 1 : vector<4x16xf32>, i32 -> vector<4x16xf32>
    %10 = tpu.concatenate %4, %5, %6, %3, %7, %8, %9 in 0 : vector<4x16xf32>, vector<4x16xf32>, vector<4x16xf32>, vector<4x16xf32>, vector<4x16xf32>, vector<4x16xf32>, vector<4x16xf32> -> vector<28x16xf32>
    %cst = arith.constant dense<0.000000e+00> : vector<12x16xf32>
    %11 = tpu.matmul %0, %10, %cst {dimension_numbers = #tpu.dot_dimension_numbers<[1], [0], [0], [1], [0, 0, 1, 1], [], []>, precision = #tpu.contract_precision<fp32>} : vector<12x28xf32>, vector<28x16xf32>, vector<12x16xf32> -> vector<12x16xf32>
    %12 = vector.broadcast %1 : vector<12x1xf32> to vector<12x16xf32>
    %13 = arith.addf %11, %12 : vector<12x16xf32>
    %c0_6 = arith.constant 0 : index
    %c0_7 = arith.constant 0 : index
    %c0_8 = arith.constant 0 : index
    %14 = vector.load %arg4[%c0_6, %c0_7, %c0_8] : memref<1x12x16xf32, #tpu.memory_space<vmem>>, vector<1x12x16xf32>
    %15 = vector.shape_cast %14 : vector<1x12x16xf32> to vector<12x16xf32>
    %16 = vector.shape_cast %13 : vector<12x16xf32> to vector<1x12x16xf32>
    tpu.vector_store %arg4[%c0_6, %c0_7, %c0_8], %16 {strides = array<i32>} : memref<1x12x16xf32, #tpu.memory_space<vmem>>, vector<1x12x16xf32>,
    return
  }
  func.func @transform_0(%arg0: i32) -> (i32, i32, i32) {
    %c0_i32 = arith.constant 0 : i32
    %c0_i32_0 = arith.constant 0 : i32
    %c0_i32_1 = arith.constant 0 : i32
    return %arg0, %c0_i32, %c0_i32_0 : i32, i32, i32
  }
  func.func @transform_1(%arg0: i32) -> (i32, i32) {
    %c0_i32 = arith.constant 0 : i32
    %c0_i32_0 = arith.constant 0 : i32
    %c0_i32_1 = arith.constant 0 : i32
    return %c0_i32, %c0_i32_0 : i32, i32
  }
  func.func @transform_2(%arg0: i32) -> (i32, i32) {
    %c0_i32 = arith.constant 0 : i32
    %c0_i32_0 = arith.constant 0 : i32
    %c0_i32_1 = arith.constant 0 : i32
    return %c0_i32, %c0_i32_0 : i32, i32
  }
  func.func @transform_3(%arg0: i32) -> (i32, i32, i32) {
    %c0_i32 = arith.constant 0 : i32
    %c0_i32_0 = arith.constant 0 : i32
    %c0_i32_1 = arith.constant 0 : i32
    return %arg0, %c0_i32, %c0_i32_0 : i32, i32, i32
  }
}

</mosaic_0001>

<llo_original>
// kernel: atrous_convolution.1
$region0: #{atrous_convolution.1}
  #allocation0 [shape = 'u32[]', space=smem, size = 0x4, offset = 0x4, fixed_abs, tag = 'smem constant byte address 0x4 - core index']
  #allocation1 [shape = 'u32[144,128]{1,0:T(1,128)}', space=vmem, size = 0x12000, scoped, tag = 'internal scratch']
  %s0 = inlined_call_operand.vmem [shape: f32[2,4,16], index: 0, kind: input, shape index: {}]
  %s1 = inlined_call_operand.vmem [shape: f32[12,28], index: 1, kind: input, shape index: {}]
  %s2 = inlined_call_operand.vmem [shape: f32[12,1], index: 2, kind: input, shape index: {}]
  %s3 = inlined_call_operand.vmem [shape: f32[2,12,16], index: 3, kind: output, shape index: {}]
  %s4 = sld [smem:[#allocation0]]
  $region45: #{atrous_convolution.1} parent=0
    _
  %s6 = ssub.s32 1, %s4
  %s7 = scalar_select 0, %s6, %s4
  loop: start=0, step=1, limit=4
  $region2: #{atrous_convolution.1} parent=0 // loop_pre_header
    _
  $region3: #{atrous_convolution.1} parent=0 // loop_header
    %s9 = sphi 0, %s13
    %p10 = scmp.ge.s32.totalorder %s9, 4
    %s19 = sphi 0, %s21
    %s22 = sphi 0, %s19
    %s23 = sphi 0, %s22
    %s39 = sphi 0, %s23
    %s43 = sphi 0, %s43
    %s45 = sphi 0, %s43
    %s46 = sphi 0, %s45
    %s60 = sphi 0, %s46
    %s64 = sphi 0, %s64
    %s66 = sphi 0, %s64
    %s67 = sphi 0, %s66
    %s81 = sphi 0, %s67
    %s87 = sphi 0, %s89
    %s90 = sphi 0, %s87
    %s91 = sphi 0, %s90
    %s107 = sphi 0, %s91
  $region4: #{atrous_convolution.1} parent=0 // loop_header_branch
    %12 = sbr.rel (%p10) target = $region8
  $region5: #{atrous_convolution.1} parent=0 // loop_body
    %s14 = ssub.s32 %s9, 1
    %s15 = ssub.s32 %s9, 2
    %s16 = sadd.s32 %s9, 1
    %s17 = ssub.s32 %s9, %s16
    %p18 = scmp.eq.s32.totalorder %s17, 0
    %s20 = sadd.s32 %s19, 1
    %s21 = scalar_select %p18, %s19, %s20
    %p24 = pneg %p18
    %p25 = scmp.eq.s32.totalorder %s9, 1
    %p26 = por %p24, %p25
    %p27 = scmp.ne.s32.totalorder %s19, %s22
    %p28 = scmp.eq.s32.totalorder %s9, 0
    %p29 = por %p27, %p28
    %p30 = scmp.ne.s32.totalorder %s19, %s22
    %p31 = scmp.eq.s32.totalorder %s14, 1
    %p32 = por %p30, %p31
    %p33 = scmp.ne.s32.totalorder %s22, %s23
    %p34 = scmp.eq.s32.totalorder %s14, 0
    %p35 = por %p33, %p34
    %p36 = scmp.ne.s32.totalorder %s22, %s23
    %p37 = scmp.eq.s32.totalorder %s15, 1
    %p38 = por %p36, %p37
    %p40 = scmp.ne.s32.totalorder %s23, %s39
    %p41 = scmp.eq.s32.totalorder %s15, 0
    %p42 = por %p40, %p41
    %s44 = sadd.s32 %s43, 1
    %p47 = scmp.eq.s32.totalorder %s9, 1
    %p48 = scmp.ne.s32.totalorder %s43, %s45
    %p49 = scmp.eq.s32.totalorder %s9, 0
    %p50 = por %p48, %p49
    %p51 = scmp.ne.s32.totalorder %s43, %s45
    %p52 = scmp.eq.s32.totalorder %s14, 1
    %p53 = por %p51, %p52
    %p54 = scmp.ne.s32.totalorder %s45, %s46
    %p55 = scmp.eq.s32.totalorder %s14, 0
    %p56 = por %p54, %p55
    %p57 = scmp.ne.s32.totalorder %s45, %s46
    %p58 = scmp.eq.s32.totalorder %s15, 1
    %p59 = por %p57, %p58
    %p61 = scmp.ne.s32.totalorder %s46, %s60
    %p62 = scmp.eq.s32.totalorder %s15, 0
    %p63 = por %p61, %p62
    %s65 = sadd.s32 %s64, 1
    %p68 = scmp.eq.s32.totalorder %s9, 1
    %p69 = scmp.ne.s32.totalorder %s64, %s66
    %p70 = scmp.eq.s32.totalorder %s9, 0
    %p71 = por %p69, %p70
    %p72 = scmp.ne.s32.totalorder %s64, %s66
    %p73 = scmp.eq.s32.totalorder %s14, 1
    %p74 = por %p72, %p73
    %p75 = scmp.ne.s32.totalorder %s66, %s67
    %p76 = scmp.eq.s32.totalorder %s14, 0
    %p77 = por %p75, %p76
    %p78 = scmp.ne.s32.totalorder %s66, %s67
    %p79 = scmp.eq.s32.totalorder %s15, 1
    %p80 = por %p78, %p79
    %p82 = scmp.ne.s32.totalorder %s67, %s81
    %p83 = scmp.eq.s32.totalorder %s15, 0
    %p84 = por %p82, %p83
    %s85 = ssub.s32 %s9, %s16
    %p86 = scmp.eq.s32.totalorder %s85, 0
    %s88 = sadd.s32 %s87, 1
    %s89 = scalar_select %p86, %s87, %s88
    %p92 = pneg %p86
    %p93 = scmp.eq.s32.totalorder %s9, 1
    %p94 = por %p92, %p93
    %p95 = scmp.ne.s32.totalorder %s87, %s90
    %p96 = scmp.eq.s32.totalorder %s9, 0
    %p97 = por %p95, %p96
    %p98 = scmp.ne.s32.totalorder %s87, %s90
    %p99 = scmp.eq.s32.totalorder %s14, 1
    %p100 = por %p98, %p99
    %p101 = scmp.ne.s32.totalorder %s90, %s91
    %p102 = scmp.eq.s32.totalorder %s14, 0
    %p103 = por %p101, %p102
    %p104 = scmp.ne.s32.totalorder %s90, %s91
    %p105 = scmp.eq.s32.totalorder %s15, 1
    %p106 = por %p104, %p105
    %p108 = scmp.ne.s32.totalorder %s91, %s107
    %p109 = scmp.eq.s32.totalorder %s15, 0
    %p110 = por %p108, %p109
    %p111 = scmp.le.s32.totalorder 1, %s9
    %p112 = scmp.lt.s32.totalorder %s9, 3
    %p113 = pnand %p111, %p112
    %p114 = pneg %p113
    // Predicated region
    $region9: #{atrous_convolution.1} parent=5 // pred_check
      _
    $region10: #{atrous_convolution.1} parent=5 // pred_check_branch
      %116 = sbr.rel (%p113) target = $region12
    $region11: #{atrous_convolution.1} parent=5 // pred_region
      %s117 = ssub.s32 %s9, 1
      // Predicated region
      $region13: #{atrous_convolution.1} parent=11 // pred_check
        %p118 = pneg %p56
      $region14: #{atrous_convolution.1} parent=11 // pred_check_branch
        %120 = sbr.rel (%p118) target = $region16
      $region15: #{atrous_convolution.1} parent=11 // pred_region
        _
      $region16: #{atrous_convolution.1} parent=11 // pred_fallthru
        _
      // Predicated region
      $region17: #{atrous_convolution.1} parent=11 // pred_check
        %p121 = pneg %p77
      $region18: #{atrous_convolution.1} parent=11 // pred_check_branch
        %123 = sbr.rel (%p121) target = $region20
      $region19: #{atrous_convolution.1} parent=11 // pred_region
        _
      $region20: #{atrous_convolution.1} parent=11 // pred_fallthru
        _
    $region12: #{atrous_convolution.1} parent=5 // pred_fallthru
      _
    %p124 = scmp.lt.s32.totalorder %s9, 2
    // Predicated region
    $region21: #{atrous_convolution.1} parent=5 // pred_check
      %p125 = pneg %p124
    $region22: #{atrous_convolution.1} parent=5 // pred_check_branch
      %127 = sbr.rel (%p125) target = $region24
    $region23: #{atrous_convolution.1} parent=5 // pred_region
      // Predicated region
      $region25: #{atrous_convolution.1} parent=23 // pred_check
        %p128 = pneg %p29
      $region26: #{atrous_convolution.1} parent=23 // pred_check_branch
        %130 = sbr.rel (%p128) target = $region28
      $region27: #{atrous_convolution.1} parent=23 // pred_region
        %p131 = scmp.lt.s32.totalorder %s9, 1
        %s132 = scalar_select %p131, %s9, 1
        %s133 = smul.addr %s132, 4
        %s134 = scalar_lea.vmem %s0, %s133
      $region28: #{atrous_convolution.1} parent=23 // pred_fallthru
        _
    $region24: #{atrous_convolution.1} parent=5 // pred_fallthru
      _
    %p135 = scmp.le.s32.totalorder 1, %s9
    %p136 = scmp.lt.s32.totalorder %s9, 3
    %p137 = pnand %p135, %p136
    %p138 = pneg %p137
    // Predicated region
    $region29: #{atrous_convolution.1} parent=5 // pred_check
      _
    $region30: #{atrous_convolution.1} parent=5 // pred_check_branch
      %140 = sbr.rel (%p137) target = $region32
    $region31: #{atrous_convolution.1} parent=5 // pred_region
      %s141 = ssub.s32 %s9, 1
      %p142 = scmp.lt.s32.totalorder %s14, 1
      %s143 = scalar_select %p142, %s14, 1
      %s144 = smul.addr %s143, 4
      %s145 = scalar_lea.vmem %s0, %s144
      %p146 = pneg %p35
      %p147 = pneg %p32
      %p148 = pneg %p56
      %p149 = pneg %p53
      %p150 = pneg %p77
      %p151 = pneg %p74
      %p152 = pneg %p103
      %p153 = pneg %p100
      %p154 = scmp.lt.s32.totalorder %s14, 1
      %s155 = scalar_select %p154, %s14, 1
      %s156 = smul.addr %s155, 2
      %s157 = smul.addr %s156, 8
      %s158 = scalar_lea.vmem %s3, %s157
      %p159 = scmp.lt.s32.totalorder %s14, 1
      %s160 = scalar_select %p159, %s14, 1
      %s161 = smul.addr %s160, 4
      %s162 = scalar_lea.vmem %s0, %s161
      %p163 = scmp.lt.s32.totalorder %s14, 1
      %s164 = scalar_select %p163, %s14, 1
      %s165 = smul.addr %s164, 2
      %s166 = smul.addr %s165, 8
      %s167 = scalar_lea.vmem %s3, %s166
      %v168 = vld [vmem:[%s1] sm:$0xff]
      %v169 = vld [vmem:[%s1 + $0x8] sm:$0xf]
      %v170 = vld [vmem:[%s2] sm:$0xff]
      %v171 = vld [vmem:[%s2 + $0x8] sm:$0xf]
      %v172 = vld [vmem:[%s162] sm:$0xf]
      %vm173 = vcmask 1047680
      %174 = vrot.lane.b32.xlu0 %v172, 16
      %v175 = vpop.permute.xlu0 %174
      %v176 = vsel %vm173, %v175, %v172
      %177 = vrot.lane.b32.xlu0 %v176, 16
      %v178 = vpop.permute.xlu0 %177
      %v179 = vsel %vm173, %v178, %v172
      %v181 = vrot.slane %v179, 4
      %182 = vrot.lane.b32.xlu0 %v181, 126
      %v183 = vpop.permute.xlu0 %182
      %185 = vrot.lane.b32.xlu0 %v179, 125
      %v186 = vpop.permute.xlu0 %185
      %v189 = vrot.slane %v172, 4
      %190 = vrot.lane.b32.xlu0 %v189, 12
      %v191 = vpop.permute.xlu0 %190
      %193 = vrot.lane.b32.xlu0 %v179, 11
      %v194 = vpop.permute.xlu0 %193
      %196 = vrot.lane.b32.xlu0 %v181, 10
      %v197 = vpop.permute.xlu0 %196
      %199 = vrot.lane.b32.xlu0 %v179, 8
      %v200 = vpop.permute.xlu0 %199
      %vm201 = vcmask 1043456
      %v202 = vsel %vm201, %v179, %v183
      %v203 = vsel %vm201, %v186, %v191
      %v204 = vsel %vm201, %v194, %v197
      %206 = vset.pattern.permute.xlu0 0
      %207 = vperm.xlu0 %206, %v170
      %v208 = vpop.permute.xlu0 %207
      %211 = vset.pattern.permute.xlu0 0
      %212 = vperm.xlu0 %211, %v171
      %v213 = vpop.permute.xlu0 %212
      %218 = vrot.lane.b32.xlu0 %v202, 116
      %v219 = vpop.permute.xlu0 %218
      %220 = vrot.lane.b32.xlu0 %v203, 116
      %v221 = vpop.permute.xlu0 %220
      %222 = vrot.lane.b32.xlu0 %v204, 116
      %v223 = vpop.permute.xlu0 %222
      %224 = vrot.lane.b32.xlu0 %v200, 116
      %v225 = vpop.permute.xlu0 %224
      %vm229 = vcmask 228352
      %v231 = vsel %vm229, %v168, 0
      %v234 = vsel %vm229, %v169, 0
      %v236 = vsel %vm201, %v225, 0
      %238 = vmatprep.subr.mxu0 0.0
      %v239 = vand.u32 %v219, 4294901760
      %240 = vmatpush1.msra.mxu0 %v239
      %241 = vmatprep.subr.mxu0 0.0
      %v242 = vand.u32 %v221, 4294901760
      %243 = vmatpush1.msra.mxu0 %v242
      %244 = vmatprep.subr.mxu0 0.0
      %v245 = vand.u32 %v223, 4294901760
      %246 = vmatpush1.msra.mxu0 %v245
      %247 = vmatprep.subr.mxu0 0.0
      %v248 = vand.u32 %v236, 4294901760
      %249 = vmatpush1.msra.mxu0 %v248
      %250 = vmatprep.subr.mxu0 0.0
      %251 = vmatpush1.msra.mxu0 0.0
      %252 = vmatprep.subr.mxu0 0.0
      %253 = vmatpush1.msra.mxu0 0.0
      %254 = vmatprep.subr.mxu0 0.0
      %255 = vmatpush1.msra.mxu0 0.0
      %256 = vmatprep.subr.mxu0 0.0
      %257 = vmatpush1.msra.mxu0 0.0
      %258 = vmatprep.subr.mxu0 0.0
      %259 = vmatpush1.msra.mxu0 0.0
      %260 = vmatprep.subr.mxu0 0.0
      %261 = vmatpush1.msra.mxu0 0.0
      %262 = vmatprep.subr.mxu0 0.0
      %263 = vmatpush1.msra.mxu0 0.0
      %264 = vmatprep.subr.mxu0 0.0
      %265 = vmatpush1.msra.mxu0 0.0
      %266 = vmatprep.subr.mxu0 0.0
      %267 = vmatpush1.msra.mxu0 0.0
      %268 = vmatprep.subr.mxu0 0.0
      %269 = vmatpush1.msra.mxu0 0.0
      %270 = vmatprep.subr.mxu0 0.0
      %271 = vmatpush1.msra.mxu0 0.0
      %272 = vmatprep.subr.mxu0 0.0
      %273 = vmatpush1.msra.mxu0 0.0
      %274 = vmatprep.subr.mxu0 0.0
      %275 = vmatpush1.msra.mxu0 0.0
      %276 = vmatprep.subr.mxu0 0.0
      %277 = vmatpush1.msra.mxu0 0.0
      %278 = vmatprep.subr.mxu0 0.0
      %279 = vmatpush1.msra.mxu0 0.0
      %280 = vmatprep.subr.mxu0 0.0
      %281 = vmatpush1.msra.mxu0 0.0
      %282 = vmatprep.subr.mxu0 0.0
      %283 = vmatpush1.msra.mxu0 0.0
      %284 = vmatprep.subr.mxu0 0.0
      %285 = vmatpush1.msra.mxu0 0.0
      %286 = vmatprep.subr.mxu0 0.0
      %287 = vmatpush1.msra.mxu0 0.0
      %288 = vmatprep.subr.mxu0 0.0
      %289 = vmatpush1.msra.mxu0 0.0
      %290 = vmatprep.subr.mxu0 0.0
      %291 = vmatpush1.msra.mxu0 0.0
      %292 = vmatprep.subr.mxu0 0.0
      %293 = vmatpush1.msra.mxu0 0.0
      %294 = vmatprep.subr.mxu0 0.0
      %295 = vmatpush1.msra.mxu0 0.0
      %296 = vmatprep.subr.mxu0 0.0
      %297 = vmatpush1.msra.mxu0 0.0
      %298 = vmatprep.subr.mxu0 0.0
      %299 = vmatpush1.msra.mxu0 0.0
      %300 = vmatprep.subr.mxu0 0.0
      %301 = vmatpush1.msra.mxu0 0.0
      %302 = vmatprep.subr.mxu0 0.0
      %303 = vmatpush1.msra.mxu0 0.0
      %304 = vmatprep.subr.mxu0 0.0
      %305 = vmatpush1.msra.mxu0 0.0
      %306 = vmatprep.mubr.f32.mxu0 0.0
      %v307 = vand.u32 %v231, 4294901760
      %v308 = vsub.f32 %v231, %v307
      %v309 = vand.u32 %v308, 4294901760
      %v310 = vsub.f32 %v308, %v309
      %v311 = vand.u32 %v310, 4294901760
      %312 = vmatmul.mubr.f32.gmra.mrb[0].mxu0 %v311
      %v313 = vpop.f32.mrb[0].mxu0
      %v314 = vadd.f32 %v208, %v313
      %v315 = vpop.f32.mrb[0].mxu0
      %316 = vmatprep.mubr.f32.mxu0 0.0
      %v317 = vand.u32 %v234, 4294901760
      %v318 = vsub.f32 %v234, %v317
      %v319 = vand.u32 %v318, 4294901760
      %v320 = vsub.f32 %v318, %v319
      %v321 = vand.u32 %v320, 4294901760
      %322 = vmatmul.mubr.f32.gmra.mrb[0].mxu0 %v321
      %v323 = vpop.f32.mrb[0].mxu0
      %v324 = vadd.f32 %v213, %v323
      %v325 = vpop.f32.mrb[0].mxu0
      %326 = vdwg.mxu0
      %327 = vmatprep.subr.mxu0 0.0
      %v328 = vand.u32 %v219, 4294901760
      %v329 = vsub.f32 %v219, %v328
      %v330 = vand.u32 %v329, 4294901760
      %v331 = vsub.f32 %v329, %v330
      %v332 = vand.u32 %v331, 4294901760
      %333 = vmatpush1.msra.mxu0 %v332
      %334 = vmatprep.subr.mxu0 0.0
      %v335 = vand.u32 %v221, 4294901760
      %v336 = vsub.f32 %v221, %v335
      %v337 = vand.u32 %v336, 4294901760
      %v338 = vsub.f32 %v336, %v337
      %v339 = vand.u32 %v338, 4294901760
      %340 = vmatpush1.msra.mxu0 %v339
      %341 = vmatprep.subr.mxu0 0.0
      %v342 = vand.u32 %v223, 4294901760
      %v343 = vsub.f32 %v223, %v342
      %v344 = vand.u32 %v343, 4294901760
      %v345 = vsub.f32 %v343, %v344
      %v346 = vand.u32 %v345, 4294901760
      %347 = vmatpush1.msra.mxu0 %v346
      %348 = vmatprep.subr.mxu0 0.0
      %v349 = vand.u32 %v236, 4294901760
      %v350 = vsub.f32 %v236, %v349
      %v351 = vand.u32 %v350, 4294901760
      %v352 = vsub.f32 %v350, %v351
      %v353 = vand.u32 %v352, 4294901760
      %354 = vmatpush1.msra.mxu0 %v353
      %355 = vmatprep.subr.mxu0 0.0
      %356 = vmatpush1.msra.mxu0 0.0
      %357 = vmatprep.subr.mxu0 0.0
      %358 = vmatpush1.msra.mxu0 0.0
      %359 = vmatprep.subr.mxu0 0.0
      %360 = vmatpush1.msra.mxu0 0.0
      %361 = vmatprep.subr.mxu0 0.0
      %362 = vmatpush1.msra.mxu0 0.0
      %363 = vmatprep.subr.mxu0 0.0
      %364 = vmatpush1.msra.mxu0 0.0
      %365 = vmatprep.subr.mxu0 0.0
      %366 = vmatpush1.msra.mxu0 0.0
      %367 = vmatprep.subr.mxu0 0.0
      %368 = vmatpush1.msra.mxu0 0.0
      %369 = vmatprep.subr.mxu0 0.0
      %370 = vmatpush1.msra.mxu0 0.0
      %371 = vmatprep.subr.mxu0 0.0
      %372 = vmatpush1.msra.mxu0 0.0
      %373 = vmatprep.subr.mxu0 0.0
      %374 = vmatpush1.msra.mxu0 0.0
      %375 = vmatprep.subr.mxu0 0.0
      %376 = vmatpush1.msra.mxu0 0.0
      %377 = vmatprep.subr.mxu0 0.0
      %378 = vmatpush1.msra.mxu0 0.0
      %379 = vmatprep.subr.mxu0 0.0
      %380 = vmatpush1.msra.mxu0 0.0
      %381 = vmatprep.subr.mxu0 0.0
      %382 = vmatpush1.msra.mxu0 0.0
      %383 = vmatprep.subr.mxu0 0.0
      %384 = vmatpush1.msra.mxu0 0.0
      %385 = vmatprep.subr.mxu0 0.0
      %386 = vmatpush1.msra.mxu0 0.0
      %387 = vmatprep.subr.mxu0 0.0
      %388 = vmatpush1.msra.mxu0 0.0
      %389 = vmatprep.subr.mxu0 0.0
      %390 = vmatpush1.msra.mxu0 0.0
      %391 = vmatprep.subr.mxu0 0.0
      %392 = vmatpush1.msra.mxu0 0.0
      %393 = vmatprep.subr.mxu0 0.0
      %394 = vmatpush1.msra.mxu0 0.0
      %395 = vmatprep.subr.mxu0 0.0
      %396 = vmatpush1.msra.mxu0 0.0
      %397 = vmatprep.subr.mxu0 0.0
      %398 = vmatpush1.msra.mxu0 0.0
      %399 = vmatprep.subr.mxu0 0.0
      %400 = vmatpush1.msra.mxu0 0.0
      %401 = vmatprep.subr.mxu0 0.0
      %402 = vmatpush1.msra.mxu0 0.0
      %403 = vmatprep.subr.mxu0 0.0
      %404 = vmatpush1.msra.mxu0 0.0
      %405 = vmatprep.subr.mxu0 0.0
      %406 = vmatpush1.msra.mxu0 0.0
      %407 = vmatprep.subr.mxu0 0.0
      %408 = vmatpush1.msra.mxu0 0.0
      %409 = vmatprep.subr.mxu0 0.0
      %410 = vmatpush1.msra.mxu0 0.0
      %411 = vmatprep.mubr.f32.mxu0 0.0
      %v412 = vand.u32 %v231, 4294901760
      %413 = vmatmul.mubr.f32.gmra.mrb[0].mxu0 %v412
      %v414 = vpop.f32.mrb[0].mxu0
      %v415 = vadd.f32 %v314, %v414
      %v416 = vpop.f32.mrb[0].mxu0
      %417 = vmatprep.mubr.f32.mxu0 0.0
      %v418 = vand.u32 %v234, 4294901760
      %419 = vmatmul.mubr.f32.gmra.mrb[0].mxu0 %v418
      %v420 = vpop.f32.mrb[0].mxu0
      %v421 = vadd.f32 %v324, %v420
      %v422 = vpop.f32.mrb[0].mxu0
      %423 = vdwg.mxu0
      %424 = vmatprep.subr.mxu0 0.0
      %v425 = vand.u32 %v219, 4294901760
      %v426 = vsub.f32 %v219, %v425
      %427 = vmatpush1.msra.mxu0 %v426
      %428 = vmatprep.subr.mxu0 0.0
      %v429 = vand.u32 %v221, 4294901760
      %v430 = vsub.f32 %v221, %v429
      %431 = vmatpush1.msra.mxu0 %v430
      %432 = vmatprep.subr.mxu0 0.0
      %v433 = vand.u32 %v223, 4294901760
      %v434 = vsub.f32 %v223, %v433
      %435 = vmatpush1.msra.mxu0 %v434
      %436 = vmatprep.subr.mxu0 0.0
      %v437 = vand.u32 %v236, 4294901760
      %v438 = vsub.f32 %v236, %v437
      %439 = vmatpush1.msra.mxu0 %v438
      %440 = vmatprep.subr.mxu0 0.0
      %441 = vmatpush1.msra.mxu0 0.0
      %442 = vmatprep.subr.mxu0 0.0
      %443 = vmatpush1.msra.mxu0 0.0
      %444 = vmatprep.subr.mxu0 0.0
      %445 = vmatpush1.msra.mxu0 0.0
      %446 = vmatprep.subr.mxu0 0.0
      %447 = vmatpush1.msra.mxu0 0.0
      %448 = vmatprep.subr.mxu0 0.0
      %449 = vmatpush1.msra.mxu0 0.0
      %450 = vmatprep.subr.mxu0 0.0
      %451 = vmatpush1.msra.mxu0 0.0
      %452 = vmatprep.subr.mxu0 0.0
      %453 = vmatpush1.msra.mxu0 0.0
      %454 = vmatprep.subr.mxu0 0.0
      %455 = vmatpush1.msra.mxu0 0.0
      %456 = vmatprep.subr.mxu0 0.0
      %457 = vmatpush1.msra.mxu0 0.0
      %458 = vmatprep.subr.mxu0 0.0
      %459 = vmatpush1.msra.mxu0 0.0
      %460 = vmatprep.subr.mxu0 0.0
      %461 = vmatpush1.msra.mxu0 0.0
      %462 = vmatprep.subr.mxu0 0.0
      %463 = vmatpush1.msra.mxu0 0.0
      %464 = vmatprep.subr.mxu0 0.0
      %465 = vmatpush1.msra.mxu0 0.0
      %466 = vmatprep.subr.mxu0 0.0
      %467 = vmatpush1.msra.mxu0 0.0
      %468 = vmatprep.subr.mxu0 0.0
      %469 = vmatpush1.msra.mxu0 0.0
      %470 = vmatprep.subr.mxu0 0.0
      %471 = vmatpush1.msra.mxu0 0.0
      %472 = vmatprep.subr.mxu0 0.0
      %473 = vmatpush1.msra.mxu0 0.0
      %474 = vmatprep.subr.mxu0 0.0
      %475 = vmatpush1.msra.mxu0 0.0
      %476 = vmatprep.subr.mxu0 0.0
      %477 = vmatpush1.msra.mxu0 0.0
      %478 = vmatprep.subr.mxu0 0.0
      %479 = vmatpush1.msra.mxu0 0.0
      %480 = vmatprep.subr.mxu0 0.0
      %481 = vmatpush1.msra.mxu0 0.0
      %482 = vmatprep.subr.mxu0 0.0
      %483 = vmatpush1.msra.mxu0 0.0
      %484 = vmatprep.subr.mxu0 0.0
      %485 = vmatpush1.msra.mxu0 0.0
      %486 = vmatprep.subr.mxu0 0.0
      %487 = vmatpush1.msra.mxu0 0.0
      %488 = vmatprep.subr.mxu0 0.0
      %489 = vmatpush1.msra.mxu0 0.0
      %490 = vmatprep.subr.mxu0 0.0
      %491 = vmatpush1.msra.mxu0 0.0
      %492 = vmatprep.subr.mxu0 0.0
      %493 = vmatpush1.msra.mxu0 0.0
      %494 = vmatprep.subr.mxu0 0.0
      %495 = vmatpush1.msra.mxu0 0.0
      %496 = vmatprep.mubr.f32.mxu0 0.0
      %v497 = vand.u32 %v231, 4294901760
      %v498 = vsub.f32 %v231, %v497
      %499 = vmatmul.mubr.f32.gmra.mrb[0].mxu0 %v498
      %v500 = vpop.f32.mrb[0].mxu0
      %v501 = vadd.f32 %v415, %v500
      %v502 = vpop.f32.mrb[0].mxu0
      %503 = vmatprep.mubr.f32.mxu0 0.0
      %v504 = vand.u32 %v234, 4294901760
      %v505 = vsub.f32 %v234, %v504
      %506 = vmatmul.mubr.f32.gmra.mrb[0].mxu0 %v505
      %v507 = vpop.f32.mrb[0].mxu0
      %v508 = vadd.f32 %v421, %v507
      %v509 = vpop.f32.mrb[0].mxu0
      %510 = vdwg.mxu0
      %511 = vmatprep.subr.mxu0 0.0
      %v512 = vand.u32 %v219, 4294901760
      %513 = vmatpush1.msra.mxu0 %v512
      %514 = vmatprep.subr.mxu0 0.0
      %v515 = vand.u32 %v221, 4294901760
      %516 = vmatpush1.msra.mxu0 %v515
      %517 = vmatprep.subr.mxu0 0.0
      %v518 = vand.u32 %v223, 4294901760
      %519 = vmatpush1.msra.mxu0 %v518
      %520 = vmatprep.subr.mxu0 0.0
      %v521 = vand.u32 %v236, 4294901760
      %522 = vmatpush1.msra.mxu0 %v521
      %523 = vmatprep.subr.mxu0 0.0
      %524 = vmatpush1.msra.mxu0 0.0
      %525 = vmatprep.subr.mxu0 0.0
      %526 = vmatpush1.msra.mxu0 0.0
      %527 = vmatprep.subr.mxu0 0.0
      %528 = vmatpush1.msra.mxu0 0.0
      %529 = vmatprep.subr.mxu0 0.0
      %530 = vmatpush1.msra.mxu0 0.0
      %531 = vmatprep.subr.mxu0 0.0
      %532 = vmatpush1.msra.mxu0 0.0
      %533 = vmatprep.subr.mxu0 0.0
      %534 = vmatpush1.msra.mxu0 0.0
      %535 = vmatprep.subr.mxu0 0.0
      %536 = vmatpush1.msra.mxu0 0.0
      %537 = vmatprep.subr.mxu0 0.0
      %538 = vmatpush1.msra.mxu0 0.0
      %539 = vmatprep.subr.mxu0 0.0
      %540 = vmatpush1.msra.mxu0 0.0
      %541 = vmatprep.subr.mxu0 0.0
      %542 = vmatpush1.msra.mxu0 0.0
      %543 = vmatprep.subr.mxu0 0.0
      %544 = vmatpush1.msra.mxu0 0.0
      %545 = vmatprep.subr.mxu0 0.0
      %546 = vmatpush1.msra.mxu0 0.0
      %547 = vmatprep.subr.mxu0 0.0
      %548 = vmatpush1.msra.mxu0 0.0
      %549 = vmatprep.subr.mxu0 0.0
      %550 = vmatpush1.msra.mxu0 0.0
      %551 = vmatprep.subr.mxu0 0.0
      %552 = vmatpush1.msra.mxu0 0.0
      %553 = vmatprep.subr.mxu0 0.0
      %554 = vmatpush1.msra.mxu0 0.0
      %555 = vmatprep.subr.mxu0 0.0
      %556 = vmatpush1.msra.mxu0 0.0
      %557 = vmatprep.subr.mxu0 0.0
      %558 = vmatpush1.msra.mxu0 0.0
      %559 = vmatprep.subr.mxu0 0.0
      %560 = vmatpush1.msra.mxu0 0.0
      %561 = vmatprep.subr.mxu0 0.0
      %562 = vmatpush1.msra.mxu0 0.0
      %563 = vmatprep.subr.mxu0 0.0
      %564 = vmatpush1.msra.mxu0 0.0
      %565 = vmatprep.subr.mxu0 0.0
      %566 = vmatpush1.msra.mxu0 0.0
      %567 = vmatprep.subr.mxu0 0.0
      %568 = vmatpush1.msra.mxu0 0.0
      %569 = vmatprep.subr.mxu0 0.0
      %570 = vmatpush1.msra.mxu0 0.0
      %571 = vmatprep.subr.mxu0 0.0
      %572 = vmatpush1.msra.mxu0 0.0
      %573 = vmatprep.subr.mxu0 0.0
      %574 = vmatpush1.msra.mxu0 0.0
      %575 = vmatprep.subr.mxu0 0.0
      %576 = vmatpush1.msra.mxu0 0.0
      %577 = vmatprep.subr.mxu0 0.0
      %578 = vmatpush1.msra.mxu0 0.0
      %579 = vmatprep.mubr.f32.mxu0 0.0
      %v580 = vand.u32 %v231, 4294901760
      %v581 = vsub.f32 %v231, %v580
      %v582 = vand.u32 %v581, 4294901760
      %583 = vmatmul.mubr.f32.gmra.mrb[0].mxu0 %v582
      %v584 = vpop.f32.mrb[0].mxu0
      %v585 = vadd.f32 %v501, %v584
      %v586 = vpop.f32.mrb[0].mxu0
      %587 = vmatprep.mubr.f32.mxu0 0.0
      %v588 = vand.u32 %v234, 4294901760
      %v589 = vsub.f32 %v234, %v588
      %v590 = vand.u32 %v589, 4294901760
      %591 = vmatmul.mubr.f32.gmra.mrb[0].mxu0 %v590
      %v592 = vpop.f32.mrb[0].mxu0
      %v593 = vadd.f32 %v508, %v592
      %v594 = vpop.f32.mrb[0].mxu0
      %595 = vdwg.mxu0
      %596 = vmatprep.subr.mxu0 0.0
      %v597 = vand.u32 %v219, 4294901760
      %v598 = vsub.f32 %v219, %v597
      %v599 = vand.u32 %v598, 4294901760
      %600 = vmatpush1.msra.mxu0 %v599
      %601 = vmatprep.subr.mxu0 0.0
      %v602 = vand.u32 %v221, 4294901760
      %v603 = vsub.f32 %v221, %v602
      %v604 = vand.u32 %v603, 4294901760
      %605 = vmatpush1.msra.mxu0 %v604
      %606 = vmatprep.subr.mxu0 0.0
      %v607 = vand.u32 %v223, 4294901760
      %v608 = vsub.f32 %v223, %v607
      %v609 = vand.u32 %v608, 4294901760
      %610 = vmatpush1.msra.mxu0 %v609
      %611 = vmatprep.subr.mxu0 0.0
      %v612 = vand.u32 %v236, 4294901760
      %v613 = vsub.f32 %v236, %v612
      %v614 = vand.u32 %v613, 4294901760
      %615 = vmatpush1.msra.mxu0 %v614
      %616 = vmatprep.subr.mxu0 0.0
      %617 = vmatpush1.msra.mxu0 0.0
      %618 = vmatprep.subr.mxu0 0.0
      %619 = vmatpush1.msra.mxu0 0.0
      %620 = vmatprep.subr.mxu0 0.0
      %621 = vmatpush1.msra.mxu0 0.0
      %622 = vmatprep.subr.mxu0 0.0
      %623 = vmatpush1.msra.mxu0 0.0
      %624 = vmatprep.subr.mxu0 0.0
      %625 = vmatpush1.msra.mxu0 0.0
      %626 = vmatprep.subr.mxu0 0.0
      %627 = vmatpush1.msra.mxu0 0.0
      %628 = vmatprep.subr.mxu0 0.0
      %629 = vmatpush1.msra.mxu0 0.0
      %630 = vmatprep.subr.mxu0 0.0
      %631 = vmatpush1.msra.mxu0 0.0
      %632 = vmatprep.subr.mxu0 0.0
      %633 = vmatpush1.msra.mxu0 0.0
      %634 = vmatprep.subr.mxu0 0.0
      %635 = vmatpush1.msra.mxu0 0.0
      %636 = vmatprep.subr.mxu0 0.0
      %637 = vmatpush1.msra.mxu0 0.0
      %638 = vmatprep.subr.mxu0 0.0
      %639 = vmatpush1.msra.mxu0 0.0
      %640 = vmatprep.subr.mxu0 0.0
      %641 = vmatpush1.msra.mxu0 0.0
      %642 = vmatprep.subr.mxu0 0.0
      %643 = vmatpush1.msra.mxu0 0.0
      %644 = vmatprep.subr.mxu0 0.0
      %645 = vmatpush1.msra.mxu0 0.0
      %646 = vmatprep.subr.mxu0 0.0
      %647 = vmatpush1.msra.mxu0 0.0
      %648 = vmatprep.subr.mxu0 0.0
      %649 = vmatpush1.msra.mxu0 0.0
      %650 = vmatprep.subr.mxu0 0.0
      %651 = vmatpush1.msra.mxu0 0.0
      %652 = vmatprep.subr.mxu0 0.0
      %653 = vmatpush1.msra.mxu0 0.0
      %654 = vmatprep.subr.mxu0 0.0
      %655 = vmatpush1.msra.mxu0 0.0
      %656 = vmatprep.subr.mxu0 0.0
      %657 = vmatpush1.msra.mxu0 0.0
      %658 = vmatprep.subr.mxu0 0.0
      %659 = vmatpush1.msra.mxu0 0.0
      %660 = vmatprep.subr.mxu0 0.0
      %661 = vmatpush1.msra.mxu0 0.0
      %662 = vmatprep.subr.mxu0 0.0
      %663 = vmatpush1.msra.mxu0 0.0
      %664 = vmatprep.subr.mxu0 0.0
      %665 = vmatpush1.msra.mxu0 0.0
      %666 = vmatprep.subr.mxu0 0.0
      %667 = vmatpush1.msra.mxu0 0.0
      %668 = vmatprep.subr.mxu0 0.0
      %669 = vmatpush1.msra.mxu0 0.0
      %670 = vmatprep.subr.mxu0 0.0
      %671 = vmatpush1.msra.mxu0 0.0
      %672 = vmatprep.mubr.f32.mxu0 0.0
      %v673 = vand.u32 %v231, 4294901760
      %674 = vmatmul.mubr.f32.gmra.mrb[0].mxu0 %v673
      %v675 = vpop.f32.mrb[0].mxu0
      %v676 = vadd.f32 %v585, %v675
      %v677 = vpop.f32.mrb[0].mxu0
      %678 = vmatprep.mubr.f32.mxu0 0.0
      %v679 = vand.u32 %v234, 4294901760
      %680 = vmatmul.mubr.f32.gmra.mrb[0].mxu0 %v679
      %v681 = vpop.f32.mrb[0].mxu0
      %v682 = vadd.f32 %v593, %v681
      %v683 = vpop.f32.mrb[0].mxu0
      %684 = vdwg.mxu0
      %685 = vmatprep.subr.mxu0 0.0
      %v686 = vand.u32 %v219, 4294901760
      %687 = vmatpush1.msra.mxu0 %v686
      %688 = vmatprep.subr.mxu0 0.0
      %v689 = vand.u32 %v221, 4294901760
      %690 = vmatpush1.msra.mxu0 %v689
      %691 = vmatprep.subr.mxu0 0.0
      %v692 = vand.u32 %v223, 4294901760
      %693 = vmatpush1.msra.mxu0 %v692
      %694 = vmatprep.subr.mxu0 0.0
      %v695 = vand.u32 %v236, 4294901760
      %696 = vmatpush1.msra.mxu0 %v695
      %697 = vmatprep.subr.mxu0 0.0
      %698 = vmatpush1.msra.mxu0 0.0
      %699 = vmatprep.subr.mxu0 0.0
      %700 = vmatpush1.msra.mxu0 0.0
      %701 = vmatprep.subr.mxu0 0.0
      %702 = vmatpush1.msra.mxu0 0.0
      %703 = vmatprep.subr.mxu0 0.0
      %704 = vmatpush1.msra.mxu0 0.0
      %705 = vmatprep.subr.mxu0 0.0
      %706 = vmatpush1.msra.mxu0 0.0
      %707 = vmatprep.subr.mxu0 0.0
      %708 = vmatpush1.msra.mxu0 0.0
      %709 = vmatprep.subr.mxu0 0.0
      %710 = vmatpush1.msra.mxu0 0.0
      %711 = vmatprep.subr.mxu0 0.0
      %712 = vmatpush1.msra.mxu0 0.0
      %713 = vmatprep.subr.mxu0 0.0
      %714 = vmatpush1.msra.mxu0 0.0
      %715 = vmatprep.subr.mxu0 0.0
      %716 = vmatpush1.msra.mxu0 0.0
      %717 = vmatprep.subr.mxu0 0.0
      %718 = vmatpush1.msra.mxu0 0.0
      %719 = vmatprep.subr.mxu0 0.0
      %720 = vmatpush1.msra.mxu0 0.0
      %721 = vmatprep.subr.mxu0 0.0
      %722 = vmatpush1.msra.mxu0 0.0
      %723 = vmatprep.subr.mxu0 0.0
      %724 = vmatpush1.msra.mxu0 0.0
      %725 = vmatprep.subr.mxu0 0.0
      %726 = vmatpush1.msra.mxu0 0.0
      %727 = vmatprep.subr.mxu0 0.0
      %728 = vmatpush1.msra.mxu0 0.0
      %729 = vmatprep.subr.mxu0 0.0
      %730 = vmatpush1.msra.mxu0 0.0
      %731 = vmatprep.subr.mxu0 0.0
      %732 = vmatpush1.msra.mxu0 0.0
      %733 = vmatprep.subr.mxu0 0.0
      %734 = vmatpush1.msra.mxu0 0.0
      %735 = vmatprep.subr.mxu0 0.0
      %736 = vmatpush1.msra.mxu0 0.0
      %737 = vmatprep.subr.mxu0 0.0
      %738 = vmatpush1.msra.mxu0 0.0
      %739 = vmatprep.subr.mxu0 0.0
      %740 = vmatpush1.msra.mxu0 0.0
      %741 = vmatprep.subr.mxu0 0.0
      %742 = vmatpush1.msra.mxu0 0.0
      %743 = vmatprep.subr.mxu0 0.0
      %744 = vmatpush1.msra.mxu0 0.0
      %745 = vmatprep.subr.mxu0 0.0
      %746 = vmatpush1.msra.mxu0 0.0
      %747 = vmatprep.subr.mxu0 0.0
      %748 = vmatpush1.msra.mxu0 0.0
      %749 = vmatprep.subr.mxu0 0.0
      %750 = vmatpush1.msra.mxu0 0.0
      %751 = vmatprep.subr.mxu0 0.0
      %752 = vmatpush1.msra.mxu0 0.0
      %753 = vmatprep.mubr.f32.mxu0 0.0
      %v754 = vand.u32 %v231, 4294901760
      %755 = vmatmul.mubr.f32.gmra.mrb[0].mxu0 %v754
      %v756 = vpop.f32.mrb[0].mxu0
      %v757 = vadd.f32 %v676, %v756
      %v758 = vpop.f32.mrb[0].mxu0
      %759 = vmatprep.mubr.f32.mxu0 0.0
      %v760 = vand.u32 %v234, 4294901760
      %761 = vmatmul.mubr.f32.gmra.mrb[0].mxu0 %v760
      %v762 = vpop.f32.mrb[0].mxu0
      %v763 = vadd.f32 %v682, %v762
      %v764 = vpop.f32.mrb[0].mxu0
      %765 = vdwg.mxu0
      %vm766 = vcmask 130048
      %767 = vst.msk [vmem:[%s167] sm:$0xff] %vm766, %v757
      %vm768 = vcmask 125952
      %769 = vst.msk [vmem:[%s167 + $0x8] sm:$0xf] %vm768, %v763
      %p770 = scmp.lt.s32.totalorder %s14, 1
      %s771 = scalar_select %p770, %s14, 1
      %s772 = smul.addr %s771, 2
      %s773 = smul.addr %s772, 8
      %s774 = scalar_lea.vmem %s3, %s773
      // Predicated region
      $region33: #{atrous_convolution.1} parent=31 // pred_check
        %p775 = pneg %p100
      $region34: #{atrous_convolution.1} parent=31 // pred_check_branch
        %777 = sbr.rel (%p775) target = $region36
      $region35: #{atrous_convolution.1} parent=31 // pred_region
        _
      $region36: #{atrous_convolution.1} parent=31 // pred_fallthru
        _
    $region32: #{atrous_convolution.1} parent=5 // pred_fallthru
      _
    %p778 = scmp.le.s32.totalorder 2, %s9
    // Predicated region
    $region37: #{atrous_convolution.1} parent=5 // pred_check
      %p779 = pneg %p778
    $region38: #{atrous_convolution.1} parent=5 // pred_check_branch
      %781 = sbr.rel (%p779) target = $region40
    $region39: #{atrous_convolution.1} parent=5 // pred_region
      %s782 = ssub.s32 %s9, 2
      // Predicated region
      $region41: #{atrous_convolution.1} parent=39 // pred_check
        %p783 = pneg %p106
      $region42: #{atrous_convolution.1} parent=39 // pred_check_branch
        %785 = sbr.rel (%p783) target = $region44
      $region43: #{atrous_convolution.1} parent=39 // pred_region
        %p786 = scmp.lt.s32.totalorder %s15, 1
        %s787 = scalar_select %p786, %s15, 1
        %s788 = smul.addr %s787, 2
        %s789 = smul.addr %s788, 8
        %s790 = scalar_lea.vmem %s3, %s789
      $region44: #{atrous_convolution.1} parent=39 // pred_fallthru
        _
    $region40: #{atrous_convolution.1} parent=5 // pred_fallthru
      _
  $region6: #{atrous_convolution.1} parent=0 // loop_footer
    %s13 = sadd.s32 1, %s9
  $region7: #{atrous_convolution.1} parent=0 // loop_footer_branch
    %8 = sbr.rel target = $region3
  $region8: #{atrous_convolution.1} parent=0 // loop_exit
    _

</llo_original>
